<compile_context>
chip_gen: v7x
topology: tpu7x:2x2x1
jax: 0.10.0
libtpu: 0.0.40
codegen_flags: <defaults>
</compile_context>

<pallas_src>
import jax
import jax.numpy as jnp
from jax.experimental import pallas as pl
from jax.experimental.pallas import tpu as pltpu


def _elemwise_kernel(x_ref, scale_ref, add_ref, sub_ref, mul_ref, div_ref, loop_ref):
    x = x_ref[...]
    add_ref[...] = x + 2.0
    sub_ref[...] = x - 1.0
    mul_ref[...] = x * 3.0
    div_ref[...] = x * 0.25                      # exact: divisor is a power of two
    loop_ref[...] = x * scale_ref[...]           # (tile_r, 1) broadcast over lanes


def _vmem_budget_bytes():
    """v7x-safe defaults; widen on 128 MiB-VMEM parts (v5e/v6e) best-effort."""
    budget, limit = 24 << 20, 32 << 20
    try:
        info = pltpu.get_tpu_info()
        if getattr(info, "vmem_capacity_bytes", 0) >= (128 << 20):
            budget, limit = 48 << 20, 64 << 20
    except Exception:
        pass
    return budget, limit


def _choose_layout(B, N, itemsize, budget):
    """Pick a lane/sublane-dense (R, C) layout and row tile for a (B, N) tensor.

    Returns (Np, C, R, tile_r): Np = per-batch length padded to 128, C divides
    Np (so every row belongs to exactly one batch), R = B*Np // C.
    """
    n_buffers = 12                                   # (1 in + 5 out) x double-buffered
    Np = ((N + 127) // 128) * 128
    T = B * Np

    # Column width: largest 128-multiple divisor of Np such that an 8-row tile
    # fits the budget; prefer widths that make R a multiple of 8 (full sublanes).
    max_c = max(128, (budget // (n_buffers * itemsize * 8) // 128) * 128)
    divisors = [d for d in range(128, Np + 1, 128) if Np % d == 0 and d <= max_c]
    if not divisors:
        divisors = [128]
    C = None
    for d in sorted(divisors, reverse=True):
        if (T // d) % 8 == 0:
            C = d
            break
    if C is None:
        C = max(divisors)
    R = T // C

    # Row tile: multiple of 8 dividing R, within the VMEM budget; on big inputs
    # keep >= 2 grid steps so v7x can shard the "parallel" axis across 2 TCs.
    max_tile_r = max(8, (budget // (n_buffers * itemsize * C) // 8) * 8)
    want_multi = (T * itemsize) > (4 << 20)
    tile_r = None
    for t in range(min(max_tile_r, R), 0, -1):
        if t % 8 == 0 and R % t == 0 and (not want_multi or R // t >= 2):
            tile_r = t
            break
    if tile_r is None:
        tile_r = R                                   # tiny array: one full block
    return Np, C, R, tile_r


def pt_module_forward(x):
    if not jnp.issubdtype(x.dtype, jnp.floating):
        # torch.div promotes integer inputs to float; this kernel targets float dtypes.
        raise NotImplementedError("pt_module_forward supports floating-point inputs only")

    B = x.shape[0]
    N = 1
    for d in x.shape[1:]:
        N *= d

    budget, vmem_limit = _vmem_budget_bytes()
    itemsize = jnp.dtype(x.dtype).itemsize
    Np, C, R, tile_r = _choose_layout(B, N, itemsize, budget)

    x2 = x.reshape(B, N)
    if Np != N:
        x2 = jnp.pad(x2, ((0, 0), (0, Np - N)))     # keep lanes unmasked for any N
    x2 = x2.reshape(R, C)

    # Per-row batch index (each batch occupies Np // C consecutive rows).
    rows_per_batch = Np // C
    scale = jnp.repeat(jnp.arange(B, dtype=x.dtype), rows_per_batch).reshape(R, 1)

    grid = (R // tile_r,)
    data_spec = pl.BlockSpec((tile_r, C), lambda i: (i, 0))
    scale_spec = pl.BlockSpec((tile_r, 1), lambda i: (i, 0))
    out_sd = jax.ShapeDtypeStruct((R, C), x.dtype)

    add, sub, mul, div, loop = pl.pallas_call(
        _elemwise_kernel,
        out_shape=(out_sd, out_sd, out_sd, out_sd, out_sd),
        grid=grid,
        in_specs=[data_spec, scale_spec],
        out_specs=(data_spec, data_spec, data_spec, data_spec, data_spec),
        compiler_params=pltpu.CompilerParams(
            dimension_semantics=("parallel",),
            vmem_limit_bytes=vmem_limit,
        ),
    )(x2, scale)

    def _unpack(y):
        y = y.reshape(B, Np)
        if Np != N:
            y = y[:, :N]
        return y.reshape(x.shape)

    return {
        "add": _unpack(add),
        "subtract": _unpack(sub),
        "multiply": _unpack(mul),
        "divide": _unpack(div),
        "loop": _unpack(loop),
    }


if __name__ == "__main__":
    key = jax.random.PRNGKey(0)
    x = jax.random.normal(key, (2, 4, 16, 16), dtype=jnp.float32)

    out = pt_module_forward(x)
    jax.block_until_ready(out)

    # reference check in plain JAX
    ref = {
        "add": x + 2.0,
        "subtract": x - 1.0,
        "multiply": x * 3.0,
        "divide": x / 4.0,
        "loop": x * jnp.arange(x.shape[0], dtype=x.dtype)[:, None, None, None],
    }
    for k in ref:
        assert jnp.allclose(out[k], ref[k], atol=1e-6), f"mismatch in {k}"

    print("KERNEL_OK")
</pallas_src>

<mosaic_0001>
module attributes {stable_mosaic.version = 11 : i64} {
  func.func @_elemwise_kernel(%arg0: i32, %arg1: memref<8x256xf32, #tpu.memory_space<vmem>>, %arg2: memref<8x1xf32, #tpu.memory_space<vmem>>, %arg3: memref<8x256xf32, #tpu.memory_space<vmem>>, %arg4: memref<8x256xf32, #tpu.memory_space<vmem>>, %arg5: memref<8x256xf32, #tpu.memory_space<vmem>>, %arg6: memref<8x256xf32, #tpu.memory_space<vmem>>, %arg7: memref<8x256xf32, #tpu.memory_space<vmem>>) attributes {dimension_semantics = [#tpu.dimension_semantics<parallel>], iteration_bounds = array<i64: 1>, scalar_prefetch = 0 : i64, scratch_operands = 0 : i64, tpu.core_type = #tpu.core_type<tc>, window_params = [{transform_indices = @transform_0, window_bounds = array<i64: 8, 256>}, {transform_indices = @transform_1, window_bounds = array<i64: 8, 1>}, {transform_indices = @transform_2, window_bounds = array<i64: 8, 256>}, {transform_indices = @transform_3, window_bounds = array<i64: 8, 256>}, {transform_indices = @transform_4, window_bounds = array<i64: 8, 256>}, {transform_indices = @transform_5, window_bounds = array<i64: 8, 256>}, {transform_indices = @transform_6, window_bounds = array<i64: 8, 256>}]} {
    %c0 = arith.constant 0 : index
    %c0_0 = arith.constant 0 : index
    %0 = vector.load %arg1[%c0, %c0_0] : memref<8x256xf32, #tpu.memory_space<vmem>>, vector<8x256xf32>
    %cst = arith.constant 2.000000e+00 : f32
    %1 = vector.broadcast %cst : f32 to vector<8x256xf32>
    %2 = arith.addf %0, %1 : vector<8x256xf32>
    %c0_1 = arith.constant 0 : index
    %c0_2 = arith.constant 0 : index
    %3 = vector.load %arg3[%c0_1, %c0_2] : memref<8x256xf32, #tpu.memory_space<vmem>>, vector<8x256xf32>
    tpu.vector_store %arg3[%c0_1, %c0_2], %2 {strides = array<i32>} : memref<8x256xf32, #tpu.memory_space<vmem>>, vector<8x256xf32>,
    %cst_3 = arith.constant 1.000000e+00 : f32
    %4 = vector.broadcast %cst_3 : f32 to vector<8x256xf32>
    %5 = arith.subf %0, %4 : vector<8x256xf32>
    %c0_4 = arith.constant 0 : index
    %c0_5 = arith.constant 0 : index
    %6 = vector.load %arg4[%c0_4, %c0_5] : memref<8x256xf32, #tpu.memory_space<vmem>>, vector<8x256xf32>
    tpu.vector_store %arg4[%c0_4, %c0_5], %5 {strides = array<i32>} : memref<8x256xf32, #tpu.memory_space<vmem>>, vector<8x256xf32>,
    %cst_6 = arith.constant 3.000000e+00 : f32
    %7 = vector.broadcast %cst_6 : f32 to vector<8x256xf32>
    %8 = arith.mulf %0, %7 : vector<8x256xf32>
    %c0_7 = arith.constant 0 : index
    %c0_8 = arith.constant 0 : index
    %9 = vector.load %arg5[%c0_7, %c0_8] : memref<8x256xf32, #tpu.memory_space<vmem>>, vector<8x256xf32>
    tpu.vector_store %arg5[%c0_7, %c0_8], %8 {strides = array<i32>} : memref<8x256xf32, #tpu.memory_space<vmem>>, vector<8x256xf32>,
    %cst_9 = arith.constant 2.500000e-01 : f32
    %10 = vector.broadcast %cst_9 : f32 to vector<8x256xf32>
    %11 = arith.mulf %0, %10 : vector<8x256xf32>
    %c0_10 = arith.constant 0 : index
    %c0_11 = arith.constant 0 : index
    %12 = vector.load %arg6[%c0_10, %c0_11] : memref<8x256xf32, #tpu.memory_space<vmem>>, vector<8x256xf32>
    tpu.vector_store %arg6[%c0_10, %c0_11], %11 {strides = array<i32>} : memref<8x256xf32, #tpu.memory_space<vmem>>, vector<8x256xf32>,
    %c0_12 = arith.constant 0 : index
    %c0_13 = arith.constant 0 : index
    %13 = vector.load %arg2[%c0_12, %c0_13] : memref<8x1xf32, #tpu.memory_space<vmem>>, vector<8x1xf32>
    %14 = vector.broadcast %13 : vector<8x1xf32> to vector<8x256xf32>
    %15 = arith.mulf %0, %14 : vector<8x256xf32>
    %c0_14 = arith.constant 0 : index
    %c0_15 = arith.constant 0 : index
    %16 = vector.load %arg7[%c0_14, %c0_15] : memref<8x256xf32, #tpu.memory_space<vmem>>, vector<8x256xf32>
    tpu.vector_store %arg7[%c0_14, %c0_15], %15 {strides = array<i32>} : memref<8x256xf32, #tpu.memory_space<vmem>>, vector<8x256xf32>,
    return
  }
  func.func @transform_0(%arg0: i32) -> (i32, i32) {
    %c0_i32 = arith.constant 0 : i32
    %c0_i32_0 = arith.constant 0 : i32
    return %arg0, %c0_i32 : i32, i32
  }
  func.func @transform_1(%arg0: i32) -> (i32, i32) {
    %c0_i32 = arith.constant 0 : i32
    %c0_i32_0 = arith.constant 0 : i32
    return %arg0, %c0_i32 : i32, i32
  }
  func.func @transform_2(%arg0: i32) -> (i32, i32) {
    %c0_i32 = arith.constant 0 : i32
    %c0_i32_0 = arith.constant 0 : i32
    return %arg0, %c0_i32 : i32, i32
  }
  func.func @transform_3(%arg0: i32) -> (i32, i32) {
    %c0_i32 = arith.constant 0 : i32
    %c0_i32_0 = arith.constant 0 : i32
    return %arg0, %c0_i32 : i32, i32
  }
  func.func @transform_4(%arg0: i32) -> (i32, i32) {
    %c0_i32 = arith.constant 0 : i32
    %c0_i32_0 = arith.constant 0 : i32
    return %arg0, %c0_i32 : i32, i32
  }
  func.func @transform_5(%arg0: i32) -> (i32, i32) {
    %c0_i32 = arith.constant 0 : i32
    %c0_i32_0 = arith.constant 0 : i32
    return %arg0, %c0_i32 : i32, i32
  }
  func.func @transform_6(%arg0: i32) -> (i32, i32) {
    %c0_i32 = arith.constant 0 : i32
    %c0_i32_0 = arith.constant 0 : i32
    return %arg0, %c0_i32 : i32, i32
  }
}

</mosaic_0001>

<llo_original>
// kernel: tpu_custom_call.1
$region0: #{tpu_custom_call.1}
  #allocation0 [shape = 'u32[]', space=smem, size = 0x4, offset = 0x4, fixed_abs, tag = 'smem constant byte address 0x4 - core index']
  #allocation1 [shape = 'u32[144,128]{1,0:T(1,128)}', space=vmem, size = 0x12000, scoped, tag = 'internal scratch']
  %s0 = inlined_call_operand.hbm [shape: f32[8,256], index: 0, kind: input, shape index: {}]
  %s1 = inlined_call_operand.vmem [shape: f32[8,1], index: 1, kind: input, shape index: {}]
  %s2 = inlined_call_operand.hbm [shape: f32[8,256], index: 2, kind: output, shape index: {0}]
  %s3 = inlined_call_operand.hbm [shape: f32[8,256], index: 3, kind: output, shape index: {1}]
  %s4 = inlined_call_operand.hbm [shape: f32[8,256], index: 4, kind: output, shape index: {2}]
  %s5 = inlined_call_operand.hbm [shape: f32[8,256], index: 5, kind: output, shape index: {3}]
  %s6 = inlined_call_operand.hbm [shape: f32[8,256], index: 6, kind: output, shape index: {4}]
  %7 = xla_tuple %s2, %s3, %s4, %s5, %s6
  %s8 = sld [smem:[#allocation0]]
  $region54: #{tpu_custom_call.1} parent=0
    _
  %s10 = ssub.s32 1, %s8
  %s11 = scalar_select 0, %s10, %s8
  $region1: #{tpu_custom_call.1} parent=0
    #allocation2 [shape = 'u8[8192]{0}', space=vmem, size = 0x2000, scoped, tag = 'input window, operand 0, single buffered']
    #allocation3 [shape = 's32[1]{0}', space=sflag, size = 0x4, scoped, tag = 'scoped memory for tpu_custom_call.1']
    #allocation4 [shape = 's32[1]{0}', space=sflag, size = 0x4, scoped, tag = 'scoped memory for tpu_custom_call.1']
    #allocation5 [shape = 'u8[8192]{0}', space=vmem, size = 0x2000, scoped, tag = 'output window, operand 0, single buffered']
    #allocation6 [shape = 'u8[8192]{0}', space=vmem, size = 0x2000, scoped, tag = 'output window, operand 1, single buffered']
    #allocation7 [shape = 's32[1]{0}', space=sflag, size = 0x4, scoped, tag = 'scoped memory for tpu_custom_call.1']
    #allocation8 [shape = 'u8[8192]{0}', space=vmem, size = 0x2000, scoped, tag = 'output window, operand 2, single buffered']
    #allocation9 [shape = 'u8[8192]{0}', space=vmem, size = 0x2000, scoped, tag = 'output window, operand 3, single buffered']
    #allocation10 [shape = 's32[1]{0}', space=sflag, size = 0x4, scoped, tag = 'scoped memory for tpu_custom_call.1']
    #allocation11 [shape = 'u8[8192]{0}', space=vmem, size = 0x2000, scoped, tag = 'output window, operand 4, single buffered']
    %12 = vsyncpa [#allocation3], 0
    %13 = vsyncpa [#allocation4], 0
    %14 = vsyncpa [#allocation7], 0
    %15 = vsyncpa [#allocation10], 0
    // Predicated region
    $region2: #{tpu_custom_call.1} parent=1 // pred_check
      _
    $region3: #{tpu_custom_call.1} parent=1 // pred_check_branch
      %17 = sbr.rel (0) target = $region5
    $region4: #{tpu_custom_call.1} parent=1 // pred_region
      %s19 = ssub.s32 256, 256
      %20 = vsyncadd [#allocation3], %s19
      %s22 = sshll.u32 [#allocation2], 4
      %s23 = int_to_ptr.vmem [resolvable:$true] %s22
      %25 = dma.hbm_to_vmem [thread:$0]  %s0, 256, %s23, [#allocation3]
    $region5: #{tpu_custom_call.1} parent=1 // pred_fallthru
      _
    // Predicated region
    $region6: #{tpu_custom_call.1} parent=1 // pred_check
      _
    $region7: #{tpu_custom_call.1} parent=1 // pred_check_branch
      %27 = sbr.rel (0) target = $region9
    $region8: #{tpu_custom_call.1} parent=1 // pred_region
      _
    $region9: #{tpu_custom_call.1} parent=1 // pred_fallthru
      _
    // Predicated region
    $region10: #{tpu_custom_call.1} parent=1 // pred_check
      _
    $region11: #{tpu_custom_call.1} parent=1 // pred_check_branch
      %29 = sbr.rel (0) target = $region13
    $region12: #{tpu_custom_call.1} parent=1 // pred_region
      %30 = dma.done [#allocation3], 256
    $region13: #{tpu_custom_call.1} parent=1 // pred_fallthru
      _
    %v31 = vld [vmem:[#allocation2] sm:$0xff]
    %v32 = vld [vmem:[#allocation2 + $0x8] sm:$0xff]
    %v33 = vadd.f32 %v31, 2.0
    %v34 = vadd.f32 %v32, 2.0
    %35 = vst [vmem:[#allocation5] sm:$0xff] %v33
    %36 = vst [vmem:[#allocation5 + $0x8] sm:$0xff] %v34
    %v37 = vsub.f32 %v31, 1.0
    %v38 = vsub.f32 %v32, 1.0
    %39 = vst [vmem:[#allocation6] sm:$0xff] %v37
    %40 = vst [vmem:[#allocation6 + $0x8] sm:$0xff] %v38
    %v41 = vmul.f32 %v31, 3.0
    %v42 = vmul.f32 %v32, 3.0
    %43 = vst [vmem:[#allocation8] sm:$0xff] %v41
    %44 = vst [vmem:[#allocation8 + $0x8] sm:$0xff] %v42
    %v45 = vmul.f32 %v31, 0.25
    %v46 = vmul.f32 %v32, 0.25
    %47 = vst [vmem:[#allocation9] sm:$0xff] %v45
    %48 = vst [vmem:[#allocation9 + $0x8] sm:$0xff] %v46
    %v49 = vld [vmem:[%s1] sm:$0xff]
    %51 = vset.pattern.permute.xlu0 0
    %52 = vperm.xlu0 %51, %v49
    %v53 = vpop.permute.xlu0 %52
    %v55 = vmul.f32 %v31, %v53
    %v56 = vmul.f32 %v32, %v53
    %57 = vst [vmem:[#allocation11] sm:$0xff] %v55
    %58 = vst [vmem:[#allocation11 + $0x8] sm:$0xff] %v56
    // Predicated region
    $region14: #{tpu_custom_call.1} parent=1 // pred_check
      _
    $region15: #{tpu_custom_call.1} parent=1 // pred_check_branch
      %60 = sbr.rel (0) target = $region17
    $region16: #{tpu_custom_call.1} parent=1 // pred_region
      %s62 = ssub.s32 256, 256
      %63 = vsyncadd [#allocation4], %s62
      %s65 = sshll.u32 [#allocation5], 4
      %s66 = int_to_ptr.vmem [resolvable:$true] %s65
      %68 = dma.vmem_to_hbm [thread:$0]  %s66, 256, %s2, [#allocation4]
    $region17: #{tpu_custom_call.1} parent=1 // pred_fallthru
      _
    // Predicated region
    $region18: #{tpu_custom_call.1} parent=1 // pred_check
      _
    $region19: #{tpu_custom_call.1} parent=1 // pred_check_branch
      %70 = sbr.rel (0) target = $region21
    $region20: #{tpu_custom_call.1} parent=1 // pred_region
      %s72 = ssub.s32 256, 256
      %73 = vsyncadd [#allocation7], %s72
      %s75 = sshll.u32 [#allocation6], 4
      %s76 = int_to_ptr.vmem [resolvable:$true] %s75
      %78 = dma.vmem_to_hbm [thread:$0]  %s76, 256, %s3, [#allocation7]
    $region21: #{tpu_custom_call.1} parent=1 // pred_fallthru
      _
    // Predicated region
    $region22: #{tpu_custom_call.1} parent=1 // pred_check
      _
    $region23: #{tpu_custom_call.1} parent=1 // pred_check_branch
      %80 = sbr.rel (0) target = $region25
    $region24: #{tpu_custom_call.1} parent=1 // pred_region
      %s82 = ssub.s32 256, 256
      %83 = vsyncadd [#allocation7], %s82
      %s85 = sshll.u32 [#allocation8], 4
      %s86 = int_to_ptr.vmem [resolvable:$true] %s85
      %88 = dma.vmem_to_hbm [thread:$0]  %s86, 256, %s4, [#allocation7]
    $region25: #{tpu_custom_call.1} parent=1 // pred_fallthru
      _
    // Predicated region
    $region26: #{tpu_custom_call.1} parent=1 // pred_check
      _
    $region27: #{tpu_custom_call.1} parent=1 // pred_check_branch
      %90 = sbr.rel (0) target = $region29
    $region28: #{tpu_custom_call.1} parent=1 // pred_region
      %s92 = ssub.s32 256, 256
      %93 = vsyncadd [#allocation10], %s92
      %s95 = sshll.u32 [#allocation9], 4
      %s96 = int_to_ptr.vmem [resolvable:$true] %s95
      %98 = dma.vmem_to_hbm [thread:$0]  %s96, 256, %s5, [#allocation10]
    $region29: #{tpu_custom_call.1} parent=1 // pred_fallthru
      _
    // Predicated region
    $region30: #{tpu_custom_call.1} parent=1 // pred_check
      _
    $region31: #{tpu_custom_call.1} parent=1 // pred_check_branch
      %100 = sbr.rel (0) target = $region33
    $region32: #{tpu_custom_call.1} parent=1 // pred_region
      %s102 = ssub.s32 256, 256
      %103 = vsyncadd [#allocation10], %s102
      %s105 = sshll.u32 [#allocation11], 4
      %s106 = int_to_ptr.vmem [resolvable:$true] %s105
      %108 = dma.vmem_to_hbm [thread:$0]  %s106, 256, %s6, [#allocation10]
    $region33: #{tpu_custom_call.1} parent=1 // pred_fallthru
      _
    // Predicated region
    $region34: #{tpu_custom_call.1} parent=1 // pred_check
      _
    $region35: #{tpu_custom_call.1} parent=1 // pred_check_branch
      %110 = sbr.rel (0) target = $region37
    $region36: #{tpu_custom_call.1} parent=1 // pred_region
      %111 = dma.done [#allocation4], 256
    $region37: #{tpu_custom_call.1} parent=1 // pred_fallthru
      _
    // Predicated region
    $region38: #{tpu_custom_call.1} parent=1 // pred_check
      _
    $region39: #{tpu_custom_call.1} parent=1 // pred_check_branch
      %113 = sbr.rel (0) target = $region41
    $region40: #{tpu_custom_call.1} parent=1 // pred_region
      %114 = dma.done [#allocation7], 256
    $region41: #{tpu_custom_call.1} parent=1 // pred_fallthru
      _
    // Predicated region
    $region42: #{tpu_custom_call.1} parent=1 // pred_check
      _
    $region43: #{tpu_custom_call.1} parent=1 // pred_check_branch
      %116 = sbr.rel (0) target = $region45
    $region44: #{tpu_custom_call.1} parent=1 // pred_region
      %117 = dma.done [#allocation7], 256
    $region45: #{tpu_custom_call.1} parent=1 // pred_fallthru
      _
    // Predicated region
    $region46: #{tpu_custom_call.1} parent=1 // pred_check
      _
    $region47: #{tpu_custom_call.1} parent=1 // pred_check_branch
      %119 = sbr.rel (0) target = $region49
    $region48: #{tpu_custom_call.1} parent=1 // pred_region
      %120 = dma.done [#allocation10], 256
    $region49: #{tpu_custom_call.1} parent=1 // pred_fallthru
      _
    // Predicated region
    $region50: #{tpu_custom_call.1} parent=1 // pred_check
      _
    $region51: #{tpu_custom_call.1} parent=1 // pred_check_branch
      %122 = sbr.rel (0) target = $region53
    $region52: #{tpu_custom_call.1} parent=1 // pred_region
      %123 = dma.done [#allocation10], 256
    $region53: #{tpu_custom_call.1} parent=1 // pred_fallthru
      _
    %124 = vsyncpa [#allocation3], 1
    %125 = vsyncpa [#allocation4], 1
    %126 = vsyncpa [#allocation7], 1
    %127 = vsyncpa [#allocation10], 1

</llo_original>
